<compile_context>
chip_gen: v5e
topology: v5e:2x2
jax: 0.10.0
libtpu: 0.0.40
codegen_flags: <defaults>
</compile_context>

<pallas_src>
import jax
import jax.numpy as jnp
from jax.experimental import pallas as pl
from jax.experimental.pallas import tpu as pltpu

LEAKY_SLOPE = 0.1
BN_EPS = 1e-5


def _leaky(x):
    # max(x, a*x) == LeakyReLU(a) for 0 < a < 1.
    return jnp.maximum(x, LEAKY_SLOPE * x)


def _round_up(x, m):
    return (x + m - 1) // m * m


def _cdiv(a, b):
    return (a + b - 1) // b


def spp_kernel(x_ref, w0_ref, b0_ref, w1_ref, b1_ref, o_ref):
    # x_ref : (C, TILE_P) bf16, pixels on the lane axis (lane-dense ld/st)
    # w0_ref: (2C, C) bf16   b0_ref: (2C, 1) f32   (BN scale folded into W)
    # w1_ref: (C, 2C) bf16   b1_ref: (C, 1) f32
    # o_ref : (C, TILE_P) bf16
    x = x_ref[...]
    h = jnp.dot(w0_ref[...], x, preferred_element_type=jnp.float32)
    h = _leaky(h + b0_ref[...]).astype(jnp.bfloat16)   # back to bf16 for MXU
    y = jnp.dot(w1_ref[...], h, preferred_element_type=jnp.float32)
    y = _leaky(y + b1_ref[...])
    o_ref[...] = y.astype(o_ref.dtype)


def _vmem_policy():
    """Returns (tiling_budget_bytes, vmem_limit_bytes), generation-aware."""
    try:
        cap = int(pltpu.get_tpu_info().vmem_capacity_bytes)
    except Exception:
        cap = 64 * 1024 * 1024          # assume the smallest modern part (v7x)
    # 48 MiB limit on 64 MiB parts (v7x), 96 MiB on 128 MiB parts (v5e/v6e).
    vmem_limit = min(int(cap * 0.75), 96 * 1024 * 1024)
    reserve = 6 * 1024 * 1024           # Mosaic internal scratch + spill headroom
    budget = min(vmem_limit - reserve, 64 * 1024 * 1024)
    return budget, vmem_limit


def spp_forward(x_nchw, params, *, max_tile_p=4096):
    """x_nchw: (N, C, H, W).  Pass bf16 from the producer to avoid an extra
    cast pass over HBM (f32 inputs are cast here as a fallback).
    Returns (N, C, H, W) bf16."""
    N, C, H, W = x_nchw.shape
    w0_t, s0, b0, w1_t, s1, b1 = params
    C2 = w0_t.shape[0]

    # Fold BN scale into the conv weights (per output channel); biases stay f32.
    w0_eff = (w0_t * s0[:, None]).astype(jnp.bfloat16)   # (2C, C)
    w1_eff = (w1_t * s1[:, None]).astype(jnp.bfloat16)   # (C, 2C)
    b0_col = b0.reshape(C2, 1).astype(jnp.float32)
    b1_col = b1.reshape(C, 1).astype(jnp.float32)

    # NCHW -> (N, C, H*W): free reshape, pixels land on the lane axis.
    HW = H * W
    x3 = x_nchw.reshape(N, C, HW)
    if x3.dtype != jnp.bfloat16:
        x3 = x3.astype(jnp.bfloat16)    # fallback; prefer bf16 from the producer

    budget, vmem_limit = _vmem_policy()

    # Largest lane tile (multiple of 128) whose working set fits the budget:
    # double-buffered bf16 in/out tiles, the f32 h/y temporaries, the bf16 h
    # copy for the second matmul, and (conservatively double-buffered)
    # weights/biases.
    def vmem_need(tp):
        io = 2 * 2 * (C * tp) * 2                       # in + out, x2 bufs, bf16
        interm = (C2 * tp + C * tp) * 4 + C2 * tp * 2   # f32 h, f32 y, bf16 h
        wts = 2 * ((C2 * C + C * C2) * 2 + (C2 + C) * 4)
        return io + interm + wts

    tile_p = _round_up(min(max_tile_p, _round_up(HW, 128)), 128)
    while tile_p > 128 and vmem_need(tile_p) > budget:
        tile_p -= 128

    # v7x has 2 TensorCores: make sure the parallel grid has >= 2 steps.
    if N * _cdiv(HW, tile_p) < 2 and HW > 128:
        tile_p = _round_up(_cdiv(HW, 2), 128)

    grid = (N, _cdiv(HW, tile_p))       # ragged last block is clipped by Pallas

    # Honest scheduling hint: unpadded HW, bf16 byte counts.
    flops = 4 * N * HW * C * C2         # two 1x1-conv matmuls (MAC = 2 flops)
    bytes_accessed = (2 * 2 * N * C * HW      # bf16 activations in + out
                      + 2 * 2 * C2 * C        # bf16 weights
                      + 4 * (C2 + C))         # f32 biases

    # TODO(synk): for production calls with C < 128, pad channels to >=128 (or
    # use a VPU broadcast-FMA path) -- the K=C contraction under-uses the MXU.

    out3 = pl.pallas_call(
        spp_kernel,
        out_shape=jax.ShapeDtypeStruct((N, C, HW), jnp.bfloat16),
        grid_spec=pltpu.PrefetchScalarGridSpec(
            num_scalar_prefetch=0,
            grid=grid,
            in_specs=[
                pl.BlockSpec((None, C, tile_p), lambda n, p: (n, 0, p)),  # x
                pl.BlockSpec((C2, C), lambda n, p: (0, 0)),               # w0
                pl.BlockSpec((C2, 1), lambda n, p: (0, 0)),               # b0
                pl.BlockSpec((C, C2), lambda n, p: (0, 0)),               # w1
                pl.BlockSpec((C, 1), lambda n, p: (0, 0)),                # b1
            ],
            out_specs=pl.BlockSpec((None, C, tile_p), lambda n, p: (n, 0, p)),
        ),
        compiler_params=pltpu.CompilerParams(
            dimension_semantics=("parallel", "parallel"),
            vmem_limit_bytes=vmem_limit),
        cost_estimate=pl.CostEstimate(
            flops=flops, transcendentals=0, bytes_accessed=bytes_accessed),
    )(x3, w0_eff, b0_col, w1_eff, b1_col)

    return out3.reshape(N, C, H, W)


def make_params(key, C):
    """Synthetic parameters matching the PyTorch module's shapes.

    conv0: weight (2C, C, 1, 1), BN(2C);  conv1: weight (C, 2C, 1, 1), BN(C).
    BN folded for inference: running_mean=0, running_var=1, eps=1e-5.
    Returns (w0_t (2C,C), s0, b0, w1_t (C,2C), s1, b1), all f32.
    """
    C2 = 2 * C
    k = jax.random.split(key, 6)
    w0_t = jax.random.normal(k[0], (C2, C, 1, 1), jnp.float32)[:, :, 0, 0] * 0.1
    w1_t = jax.random.normal(k[1], (C, C2, 1, 1), jnp.float32)[:, :, 0, 0] * 0.1
    gamma0 = 1.0 + 0.1 * jax.random.normal(k[2], (C2,), jnp.float32)
    beta0 = 0.1 * jax.random.normal(k[3], (C2,), jnp.float32)
    gamma1 = 1.0 + 0.1 * jax.random.normal(k[4], (C,), jnp.float32)
    beta1 = 0.1 * jax.random.normal(k[5], (C,), jnp.float32)

    rm0 = jnp.zeros((C2,), jnp.float32)
    rv0 = jnp.ones((C2,), jnp.float32)
    rm1 = jnp.zeros((C,), jnp.float32)
    rv1 = jnp.ones((C,), jnp.float32)

    s0 = gamma0 / jnp.sqrt(rv0 + BN_EPS)
    b0 = beta0 - rm0 * s0
    s1 = gamma1 / jnp.sqrt(rv1 + BN_EPS)
    b1 = beta1 - rm1 * s1
    return (w0_t, s0, b0, w1_t, s1, b1)


def spp_reference(x_nchw, params):
    """Pure-JAX f32 reference with UNFUSED BN (validates the scale/bias fold)."""
    w0_t, s0, b0, w1_t, s1, b1 = params
    N, C, H, W = x_nchw.shape
    hp = jax.lax.Precision.HIGHEST
    x = x_nchw.reshape(N, C, H * W)
    h = _leaky(jnp.einsum('oi,nip->nop', w0_t, x, precision=hp)
               * s0[None, :, None] + b0[None, :, None])
    y = _leaky(jnp.einsum('oi,nip->nop', w1_t, h, precision=hp)
               * s1[None, :, None] + b1[None, :, None])
    return y.reshape(N, C, H, W)


if __name__ == "__main__":
    key = jax.random.PRNGKey(0)
    kx, kp = jax.random.split(key)

    N, C, H, W = 2, 4, 16, 16  # in_channel = 4
    x_f32 = jax.random.normal(kx, (N, C, H, W), jnp.float32)
    params = make_params(kp, C)

    # Producer-side cast: HBM-resident activations are kept in bf16.
    x = x_f32.astype(jnp.bfloat16)

    out = jax.block_until_ready(spp_forward(x, params))

    # f32 reference over the same bf16-quantized input; tolerance covers bf16
    # weight / intermediate rounding (accumulation is f32 in the kernel).
    ref = spp_reference(x.astype(jnp.float32), params)
    assert out.shape == (N, C, H, W)
    assert out.dtype == jnp.bfloat16
    out_f32 = out.astype(jnp.float32)
    max_err = float(jnp.max(jnp.abs(out_f32 - ref)))
    assert jnp.allclose(out_f32, ref, atol=3e-2, rtol=3e-2), max_err

    print("KERNEL_OK")
</pallas_src>

<mosaic_0001>
module attributes {stable_mosaic.version = 11 : i64} {
  func.func @spp_kernel(%arg0: i32, %arg1: i32, %arg2: memref<1x4x256xbf16, #tpu.memory_space<vmem>>, %arg3: memref<8x4xbf16, #tpu.memory_space<vmem>>, %arg4: memref<8x1xf32, #tpu.memory_space<vmem>>, %arg5: memref<4x8xbf16, #tpu.memory_space<vmem>>, %arg6: memref<4x1xf32, #tpu.memory_space<vmem>>, %arg7: memref<1x4x256xbf16, #tpu.memory_space<vmem>>) attributes {dimension_semantics = [#tpu.dimension_semantics<parallel>, #tpu.dimension_semantics<parallel>], iteration_bounds = array<i64: 2, 1>, scalar_prefetch = 0 : i64, scratch_operands = 0 : i64, tpu.core_type = #tpu.core_type<tc>, window_params = [{transform_indices = @transform_0, window_bounds = array<i64: 1, 4, 256>}, {pipeline_mode = #tpu.pipeline_mode<synchronous>, transform_indices = @transform_1, window_bounds = array<i64: 8, 4>}, {pipeline_mode = #tpu.pipeline_mode<synchronous>, transform_indices = @transform_2, window_bounds = array<i64: 8, 1>}, {pipeline_mode = #tpu.pipeline_mode<synchronous>, transform_indices = @transform_3, window_bounds = array<i64: 4, 8>}, {pipeline_mode = #tpu.pipeline_mode<synchronous>, transform_indices = @transform_4, window_bounds = array<i64: 4, 1>}, {transform_indices = @transform_5, window_bounds = array<i64: 1, 4, 256>}]} {
    %c0 = arith.constant 0 : index
    %c0_0 = arith.constant 0 : index
    %c0_1 = arith.constant 0 : index
    %0 = vector.load %arg2[%c0, %c0_0, %c0_1] : memref<1x4x256xbf16, #tpu.memory_space<vmem>>, vector<1x4x256xbf16>
    %1 = vector.shape_cast %0 : vector<1x4x256xbf16> to vector<4x256xbf16>
    %c0_2 = arith.constant 0 : index
    %c0_3 = arith.constant 0 : index
    %2 = vector.load %arg3[%c0_2, %c0_3] : memref<8x4xbf16, #tpu.memory_space<vmem>>, vector<8x4xbf16>
    %cst = arith.constant dense<0.000000e+00> : vector<8x256xf32>
    %3 = tpu.matmul %2, %1, %cst {dimension_numbers = #tpu.dot_dimension_numbers<[1], [0], [0], [1], [0, 0, 1, 1], [], []>} : vector<8x4xbf16>, vector<4x256xbf16>, vector<8x256xf32> -> vector<8x256xf32>
    %c0_4 = arith.constant 0 : index
    %c0_5 = arith.constant 0 : index
    %4 = vector.load %arg4[%c0_4, %c0_5] : memref<8x1xf32, #tpu.memory_space<vmem>>, vector<8x1xf32>
    %5 = vector.broadcast %4 : vector<8x1xf32> to vector<8x256xf32>
    %6 = arith.addf %3, %5 : vector<8x256xf32>
    %cst_6 = arith.constant 1.000000e-01 : f32
    %7 = vector.broadcast %cst_6 : f32 to vector<8x256xf32>
    %8 = arith.mulf %7, %6 : vector<8x256xf32>
    %9 = arith.maximumf %6, %8 : vector<8x256xf32>
    %10 = arith.truncf %9 : vector<8x256xf32> to vector<8x256xbf16>
    %c0_7 = arith.constant 0 : index
    %c0_8 = arith.constant 0 : index
    %11 = vector.load %arg5[%c0_7, %c0_8] : memref<4x8xbf16, #tpu.memory_space<vmem>>, vector<4x8xbf16>
    %cst_9 = arith.constant dense<0.000000e+00> : vector<4x256xf32>
    %12 = tpu.matmul %11, %10, %cst_9 {dimension_numbers = #tpu.dot_dimension_numbers<[1], [0], [0], [1], [0, 0, 1, 1], [], []>} : vector<4x8xbf16>, vector<8x256xbf16>, vector<4x256xf32> -> vector<4x256xf32>
    %c0_10 = arith.constant 0 : index
    %c0_11 = arith.constant 0 : index
    %13 = vector.load %arg6[%c0_10, %c0_11] : memref<4x1xf32, #tpu.memory_space<vmem>>, vector<4x1xf32>
    %14 = vector.broadcast %13 : vector<4x1xf32> to vector<4x256xf32>
    %15 = arith.addf %12, %14 : vector<4x256xf32>
    %cst_12 = arith.constant 1.000000e-01 : f32
    %16 = vector.broadcast %cst_12 : f32 to vector<4x256xf32>
    %17 = arith.mulf %16, %15 : vector<4x256xf32>
    %18 = arith.maximumf %15, %17 : vector<4x256xf32>
    %19 = arith.truncf %18 : vector<4x256xf32> to vector<4x256xbf16>
    %c0_13 = arith.constant 0 : index
    %c0_14 = arith.constant 0 : index
    %c0_15 = arith.constant 0 : index
    %20 = vector.load %arg7[%c0_13, %c0_14, %c0_15] : memref<1x4x256xbf16, #tpu.memory_space<vmem>>, vector<1x4x256xbf16>
    %21 = vector.shape_cast %20 : vector<1x4x256xbf16> to vector<4x256xbf16>
    %22 = vector.shape_cast %19 : vector<4x256xbf16> to vector<1x4x256xbf16>
    tpu.vector_store %arg7[%c0_13, %c0_14, %c0_15], %22 {strides = array<i32>} : memref<1x4x256xbf16, #tpu.memory_space<vmem>>, vector<1x4x256xbf16>,
    return
  }
  func.func @transform_0(%arg0: i32, %arg1: i32) -> (i32, i32, i32) {
    %c0_i32 = arith.constant 0 : i32
    %c0_i32_0 = arith.constant 0 : i32
    return %arg0, %c0_i32, %arg1 : i32, i32, i32
  }
  func.func @transform_1(%arg0: i32, %arg1: i32) -> (i32, i32) {
    %c0_i32 = arith.constant 0 : i32
    %c0_i32_0 = arith.constant 0 : i32
    %c0_i32_1 = arith.constant 0 : i32
    return %c0_i32, %c0_i32_0 : i32, i32
  }
  func.func @transform_2(%arg0: i32, %arg1: i32) -> (i32, i32) {
    %c0_i32 = arith.constant 0 : i32
    %c0_i32_0 = arith.constant 0 : i32
    %c0_i32_1 = arith.constant 0 : i32
    return %c0_i32, %c0_i32_0 : i32, i32
  }
  func.func @transform_3(%arg0: i32, %arg1: i32) -> (i32, i32) {
    %c0_i32 = arith.constant 0 : i32
    %c0_i32_0 = arith.constant 0 : i32
    %c0_i32_1 = arith.constant 0 : i32
    return %c0_i32, %c0_i32_0 : i32, i32
  }
  func.func @transform_4(%arg0: i32, %arg1: i32) -> (i32, i32) {
    %c0_i32 = arith.constant 0 : i32
    %c0_i32_0 = arith.constant 0 : i32
    %c0_i32_1 = arith.constant 0 : i32
    return %c0_i32, %c0_i32_0 : i32, i32
  }
  func.func @transform_5(%arg0: i32, %arg1: i32) -> (i32, i32, i32) {
    %c0_i32 = arith.constant 0 : i32
    %c0_i32_0 = arith.constant 0 : i32
    return %arg0, %c0_i32, %arg1 : i32, i32, i32
  }
}

</mosaic_0001>

<llo_original>
// kernel: tpu_custom_call.1
$region0: #{tpu_custom_call.1}
  #allocation0 [shape = 'u32[]', space=smem, size = 0x4, offset = 0x4, fixed_abs, tag = 'smem constant byte address 0x4 - core index']
  #allocation1 [shape = 'u32[72,128]{1,0:T(1,128)}', space=vmem, size = 0x9000, scoped, tag = 'internal scratch']
  %s0 = inlined_call_operand.vmem [shape: bf16[2,4,256], index: 0, kind: input, shape index: {}]
  %s1 = inlined_call_operand.vmem [shape: bf16[8,4], index: 1, kind: input, shape index: {}]
  %s2 = inlined_call_operand.vmem [shape: f32[8,1], index: 2, kind: input, shape index: {}]
  %s3 = inlined_call_operand.vmem [shape: bf16[4,8], index: 3, kind: input, shape index: {}]
  %s4 = inlined_call_operand.vmem [shape: f32[4,1], index: 4, kind: input, shape index: {}]
  %s5 = inlined_call_operand.hbm [shape: bf16[2,4,256], index: 5, kind: output, shape index: {}]
  %s6 = sld [smem:[#allocation0]]
  $region53: #{tpu_custom_call.1} parent=0
    _
  %s8 = ssub.s32 1, %s6
  %s9 = scalar_select 0, %s8, %s6
  $region1: #{tpu_custom_call.1} parent=0
    #allocation2 [shape = 'u8[4096]{0}', space=vmem, size = 0x1000, scoped, tag = 'output window, operand 0']
    #allocation3 [shape = 's32[2]{0}', space=sflag, size = 0x8, scoped, tag = 'scoped memory for tpu_custom_call.1']
    %10 = vsyncpa [#allocation3], 0
    %s11 = scalar_lea.sflag [#allocation3], 1
    %12 = vsyncpa %s11, 0
    loop: start=0, step=1, limit=4
    $region2: #{tpu_custom_call.1} parent=1 // loop_pre_header
      _
    $region3: #{tpu_custom_call.1} parent=1 // loop_header
      %s14 = sphi 0, %s18
      %p15 = scmp.ge.s32.totalorder %s14, 4
      %s21 = sphi 0, %s33
      %s22 = sphi 0, %s29
      %s23 = sphi 0, %s21
      %s24 = sphi 0, %s22
      %s25 = sphi 0, %s23
      %s26 = sphi 0, %s24
      %s38 = sphi 0, %s40
      %s41 = sphi 0, %s38
      %s42 = sphi 0, %s41
      %s58 = sphi 0, %s42
      %s62 = sphi 0, %s62
      %s64 = sphi 0, %s62
      %s65 = sphi 0, %s64
      %s79 = sphi 0, %s65
      %s83 = sphi 0, %s83
      %s85 = sphi 0, %s83
      %s86 = sphi 0, %s85
      %s100 = sphi 0, %s86
      %s104 = sphi 0, %s104
      %s106 = sphi 0, %s104
      %s107 = sphi 0, %s106
      %s121 = sphi 0, %s107
      %s125 = sphi 0, %s125
      %s127 = sphi 0, %s125
      %s128 = sphi 0, %s127
      %s142 = sphi 0, %s128
      %s150 = sphi 0, %s152
      %s153 = sphi 0, %s150
      %s154 = sphi 0, %s153
      %s170 = sphi 0, %s154
    $region4: #{tpu_custom_call.1} parent=1 // loop_header_branch
      %17 = sbr.rel (%p15) target = $region8
    $region5: #{tpu_custom_call.1} parent=1 // loop_body
      %s19 = ssub.s32 %s14, 1
      %s20 = ssub.s32 %s14, 2
      %s27 = sadd.s32 1, %s22
      %p28 = scmp.ge.s32.totalorder %s27, 1
      %s29 = scalar_select %p28, 0, %s27
      %s30 = sadd.s32 1, %s21
      %s31 = scalar_select %p28, %s30, %s21
      %p32 = scmp.ge.s32.totalorder %s31, 2
      %s33 = scalar_select %p32, 0, %s31
      %s34 = ssub.s32 %s21, %s33
      %s35 = ssub.s32 %s22, %s29
      %s36 = sor.u32 %s34, %s35
      %p37 = scmp.eq.s32.totalorder %s36, 0
      %s39 = sadd.s32 %s38, 1
      %s40 = scalar_select %p37, %s38, %s39
      %p43 = pneg %p37
      %p44 = scmp.eq.s32.totalorder %s14, 1
      %p45 = por %p43, %p44
      %p46 = scmp.ne.s32.totalorder %s38, %s41
      %p47 = scmp.eq.s32.totalorder %s14, 0
      %p48 = por %p46, %p47
      %p49 = scmp.ne.s32.totalorder %s38, %s41
      %p50 = scmp.eq.s32.totalorder %s19, 1
      %p51 = por %p49, %p50
      %p52 = scmp.ne.s32.totalorder %s41, %s42
      %p53 = scmp.eq.s32.totalorder %s19, 0
      %p54 = por %p52, %p53
      %p55 = scmp.ne.s32.totalorder %s41, %s42
      %p56 = scmp.eq.s32.totalorder %s20, 1
      %p57 = por %p55, %p56
      %p59 = scmp.ne.s32.totalorder %s42, %s58
      %p60 = scmp.eq.s32.totalorder %s20, 0
      %p61 = por %p59, %p60
      %s63 = sadd.s32 %s62, 1
      %p66 = scmp.eq.s32.totalorder %s14, 1
      %p67 = scmp.ne.s32.totalorder %s62, %s64
      %p68 = scmp.eq.s32.totalorder %s14, 0
      %p69 = por %p67, %p68
      %p70 = scmp.ne.s32.totalorder %s62, %s64
      %p71 = scmp.eq.s32.totalorder %s19, 1
      %p72 = por %p70, %p71
      %p73 = scmp.ne.s32.totalorder %s64, %s65
      %p74 = scmp.eq.s32.totalorder %s19, 0
      %p75 = por %p73, %p74
      %p76 = scmp.ne.s32.totalorder %s64, %s65
      %p77 = scmp.eq.s32.totalorder %s20, 1
      %p78 = por %p76, %p77
      %p80 = scmp.ne.s32.totalorder %s65, %s79
      %p81 = scmp.eq.s32.totalorder %s20, 0
      %p82 = por %p80, %p81
      %s84 = sadd.s32 %s83, 1
      %p87 = scmp.eq.s32.totalorder %s14, 1
      %p88 = scmp.ne.s32.totalorder %s83, %s85
      %p89 = scmp.eq.s32.totalorder %s14, 0
      %p90 = por %p88, %p89
      %p91 = scmp.ne.s32.totalorder %s83, %s85
      %p92 = scmp.eq.s32.totalorder %s19, 1
      %p93 = por %p91, %p92
      %p94 = scmp.ne.s32.totalorder %s85, %s86
      %p95 = scmp.eq.s32.totalorder %s19, 0
      %p96 = por %p94, %p95
      %p97 = scmp.ne.s32.totalorder %s85, %s86
      %p98 = scmp.eq.s32.totalorder %s20, 1
      %p99 = por %p97, %p98
      %p101 = scmp.ne.s32.totalorder %s86, %s100
      %p102 = scmp.eq.s32.totalorder %s20, 0
      %p103 = por %p101, %p102
      %s105 = sadd.s32 %s104, 1
      %p108 = scmp.eq.s32.totalorder %s14, 1
      %p109 = scmp.ne.s32.totalorder %s104, %s106
      %p110 = scmp.eq.s32.totalorder %s14, 0
      %p111 = por %p109, %p110
      %p112 = scmp.ne.s32.totalorder %s104, %s106
      %p113 = scmp.eq.s32.totalorder %s19, 1
      %p114 = por %p112, %p113
      %p115 = scmp.ne.s32.totalorder %s106, %s107
      %p116 = scmp.eq.s32.totalorder %s19, 0
      %p117 = por %p115, %p116
      %p118 = scmp.ne.s32.totalorder %s106, %s107
      %p119 = scmp.eq.s32.totalorder %s20, 1
      %p120 = por %p118, %p119
      %p122 = scmp.ne.s32.totalorder %s107, %s121
      %p123 = scmp.eq.s32.totalorder %s20, 0
      %p124 = por %p122, %p123
      %s126 = sadd.s32 %s125, 1
      %p129 = scmp.eq.s32.totalorder %s14, 1
      %p130 = scmp.ne.s32.totalorder %s125, %s127
      %p131 = scmp.eq.s32.totalorder %s14, 0
      %p132 = por %p130, %p131
      %p133 = scmp.ne.s32.totalorder %s125, %s127
      %p134 = scmp.eq.s32.totalorder %s19, 1
      %p135 = por %p133, %p134
      %p136 = scmp.ne.s32.totalorder %s127, %s128
      %p137 = scmp.eq.s32.totalorder %s19, 0
      %p138 = por %p136, %p137
      %p139 = scmp.ne.s32.totalorder %s127, %s128
      %p140 = scmp.eq.s32.totalorder %s20, 1
      %p141 = por %p139, %p140
      %p143 = scmp.ne.s32.totalorder %s128, %s142
      %p144 = scmp.eq.s32.totalorder %s20, 0
      %p145 = por %p143, %p144
      %s146 = ssub.s32 %s21, %s33
      %s147 = ssub.s32 %s22, %s29
      %s148 = sor.u32 %s146, %s147
      %p149 = scmp.eq.s32.totalorder %s148, 0
      %s151 = sadd.s32 %s150, 1
      %s152 = scalar_select %p149, %s150, %s151
      %p155 = pneg %p149
      %p156 = scmp.eq.s32.totalorder %s14, 1
      %p157 = por %p155, %p156
      %p158 = scmp.ne.s32.totalorder %s150, %s153
      %p159 = scmp.eq.s32.totalorder %s14, 0
      %p160 = por %p158, %p159
      %p161 = scmp.ne.s32.totalorder %s150, %s153
      %p162 = scmp.eq.s32.totalorder %s19, 1
      %p163 = por %p161, %p162
      %p164 = scmp.ne.s32.totalorder %s153, %s154
      %p165 = scmp.eq.s32.totalorder %s19, 0
      %p166 = por %p164, %p165
      %p167 = scmp.ne.s32.totalorder %s153, %s154
      %p168 = scmp.eq.s32.totalorder %s20, 1
      %p169 = por %p167, %p168
      %p171 = scmp.ne.s32.totalorder %s154, %s170
      %p172 = scmp.eq.s32.totalorder %s20, 0
      %p173 = por %p171, %p172
      %p174 = scmp.le.s32.totalorder 1, %s14
      %p175 = scmp.lt.s32.totalorder %s14, 3
      %p176 = pnand %p174, %p175
      %p177 = pneg %p176
      // Predicated region
      $region9: #{tpu_custom_call.1} parent=5 // pred_check
        _
      $region10: #{tpu_custom_call.1} parent=5 // pred_check_branch
        %179 = sbr.rel (%p176) target = $region12
      $region11: #{tpu_custom_call.1} parent=5 // pred_region
        %s180 = ssub.s32 %s14, 1
        // Predicated region
        $region13: #{tpu_custom_call.1} parent=11 // pred_check
          %p181 = pneg %p75
        $region14: #{tpu_custom_call.1} parent=11 // pred_check_branch
          %183 = sbr.rel (%p181) target = $region16
        $region15: #{tpu_custom_call.1} parent=11 // pred_region
          _
        $region16: #{tpu_custom_call.1} parent=11 // pred_fallthru
          _
        // Predicated region
        $region17: #{tpu_custom_call.1} parent=11 // pred_check
          %p184 = pneg %p96
        $region18: #{tpu_custom_call.1} parent=11 // pred_check_branch
          %186 = sbr.rel (%p184) target = $region20
        $region19: #{tpu_custom_call.1} parent=11 // pred_region
          _
        $region20: #{tpu_custom_call.1} parent=11 // pred_fallthru
          _
        // Predicated region
        $region21: #{tpu_custom_call.1} parent=11 // pred_check
          %p187 = pneg %p117
        $region22: #{tpu_custom_call.1} parent=11 // pred_check_branch
          %189 = sbr.rel (%p187) target = $region24
        $region23: #{tpu_custom_call.1} parent=11 // pred_region
          _
        $region24: #{tpu_custom_call.1} parent=11 // pred_fallthru
          _
        // Predicated region
        $region25: #{tpu_custom_call.1} parent=11 // pred_check
          %p190 = pneg %p138
        $region26: #{tpu_custom_call.1} parent=11 // pred_check_branch
          %192 = sbr.rel (%p190) target = $region28
        $region27: #{tpu_custom_call.1} parent=11 // pred_region
          _
        $region28: #{tpu_custom_call.1} parent=11 // pred_fallthru
          _
      $region12: #{tpu_custom_call.1} parent=5 // pred_fallthru
        _
      %p193 = scmp.lt.s32.totalorder %s14, 2
      // Predicated region
      $region29: #{tpu_custom_call.1} parent=5 // pred_check
        %p194 = pneg %p193
      $region30: #{tpu_custom_call.1} parent=5 // pred_check_branch
        %196 = sbr.rel (%p194) target = $region32
      $region31: #{tpu_custom_call.1} parent=5 // pred_region
        // Predicated region
        $region33: #{tpu_custom_call.1} parent=31 // pred_check
          %p197 = pneg %p48
        $region34: #{tpu_custom_call.1} parent=31 // pred_check_branch
          %199 = sbr.rel (%p197) target = $region36
        $region35: #{tpu_custom_call.1} parent=31 // pred_region
          %s200 = smul.u32 2, %s22
          %p201 = scmp.lt.s32.totalorder %s21, 1
          %s202 = scalar_select %p201, %s21, 1
          %p203 = scmp.lt.s32.totalorder %s200, 1
          %s204 = scalar_select %p203, %s200, 1
          %s205 = smul.addr %s202, 2
          %s206 = sadd.s32 %s204, %s205
          %s207 = smul.addr %s206, 2
          %s208 = scalar_lea.vmem %s0, %s207
          %s209 = smul.u32 2, %s22
        $region36: #{tpu_custom_call.1} parent=31 // pred_fallthru
          _
      $region32: #{tpu_custom_call.1} parent=5 // pred_fallthru
        _
      %p210 = scmp.le.s32.totalorder 1, %s14
      %p211 = scmp.lt.s32.totalorder %s14, 3
      %p212 = pnand %p210, %p211
      %p213 = pneg %p212
      // Predicated region
      $region37: #{tpu_custom_call.1} parent=5 // pred_check
        _
      $region38: #{tpu_custom_call.1} parent=5 // pred_check_branch
        %215 = sbr.rel (%p212) target = $region40
      $region39: #{tpu_custom_call.1} parent=5 // pred_region
        %s216 = ssub.s32 %s14, 1
        %s217 = smul.u32 2, %s24
        %p218 = scmp.lt.s32.totalorder %s23, 1
        %s219 = scalar_select %p218, %s23, 1
        %p220 = scmp.lt.s32.totalorder %s217, 1
        %s221 = scalar_select %p220, %s217, 1
        %s222 = smul.addr %s219, 2
        %s223 = sadd.s32 %s221, %s222
        %s224 = smul.addr %s223, 2
        %s225 = scalar_lea.vmem %s0, %s224
        %p226 = pneg %p54
        %p227 = pneg %p51
        %p228 = pneg %p75
        %p229 = pneg %p72
        %p230 = pneg %p96
        %p231 = pneg %p93
        %p232 = pneg %p117
        %p233 = pneg %p114
        %p234 = pneg %p138
        %p235 = pneg %p135
        %p236 = pneg %p166
        %p237 = pneg %p163
        %s238 = sand.u32 %s153, 1
        %s239 = scalar_lea.sflag [#allocation3], %s238
        %s240 = sand.u32 %s153, 1
        %s241 = smul.addr %s240, 4
        %s242 = scalar_lea.vmem [#allocation2], %s241
        %s243 = smul.u32 2, %s24
        %p244 = scmp.lt.s32.totalorder %s23, 1
        %s245 = scalar_select %p244, %s23, 1
        %p246 = scmp.lt.s32.totalorder %s243, 1
        %s247 = scalar_select %p246, %s243, 1
        %s248 = smul.addr %s245, 2
        %s249 = sadd.s32 %s247, %s248
        %s250 = smul.addr %s249, 2
        %s251 = scalar_lea.vmem %s0, %s250
        %s252 = smul.u32 2, %s24
        %s253 = smul.u32 2, %s24
        %v255 = vld [vmem:[%s251] sm:$0xf]
        %v256 = vld [vmem:[%s1] sm:$0xf]
        %v257 = vld [vmem:[%s2] sm:$0xff]
        %259 = vset.pattern.permute.xlu0 0
        %260 = vperm.xlu0 %259, %v257
        %v261 = vpop.permute.xlu0 %260
        %264 = vst [vmem:[#allocation1] ss:$4 sm:$0xff] %v255
        %v265 = vld.sshfl [vmem:[#allocation1] sm:$0xff pattern:$0x73625140]
        %v266 = vld.sshfl [vmem:[#allocation1 + $0x8] sm:$0xff pattern:$0x73625140]
        %vm267 = vcmask 31744
        %v269 = vsel %vm267, %v256, 0
        %vm271 = vcmask 1041408
        %v272 = vsel %vm271, %v265, 0
        %v274 = vsel %vm271, %v266, 0
        %276 = vmatpush.bf16.msra.mxu0 0
        %277 = vmatpush.bf16.msra.mxu0 0
        %278 = vmatpush.bf16.msra.mxu0 0
        %279 = vmatpush.bf16.msra.mxu0 0
        %280 = vmatpush.bf16.msra.mxu0 0
        %281 = vmatpush.bf16.msra.mxu0 0
        %282 = vmatpush.bf16.msra.mxu0 0
        %283 = vmatpush.bf16.msra.mxu0 %v272
        %284 = vmatmul.bf16.gmra.mxu0 %v269
        %v285 = vpop.f32.mrf.mxu0
        %v286 = vadd.f32 %v261, %v285
        %v287 = vpop.f32.mrf.mxu0
        %288 = vdwg.mxu0
        %289 = vmatpush.bf16.msra.mxu0 0
        %290 = vmatpush.bf16.msra.mxu0 0
        %291 = vmatpush.bf16.msra.mxu0 0
        %292 = vmatpush.bf16.msra.mxu0 0
        %293 = vmatpush.bf16.msra.mxu0 0
        %294 = vmatpush.bf16.msra.mxu0 0
        %295 = vmatpush.bf16.msra.mxu0 0
        %296 = vmatpush.bf16.msra.mxu0 %v274
        %297 = vmatmul.bf16.gmra.mxu0 %v269
        %v298 = vpop.f32.mrf.mxu0
        %v299 = vadd.f32 %v261, %v298
        %v300 = vpop.f32.mrf.mxu0
        %301 = vdwg.mxu0
        %v302 = vmul.f32 %v286, 0.1
        %v303 = vmul.f32 %v299, 0.1
        %v304 = vmax.f32 %v286, %v302
        %v305 = vmax.f32 %v299, %v303
        %v306 = vpack.c.bf16 %v304, %v304
        %v307 = vpack.c.bf16 %v305, %v305
        %v308 = vld [vmem:[%s3] sm:$0x3]
        %v309 = vld [vmem:[%s4] sm:$0xf]
        %311 = vset.pattern.permute.xlu0 0
        %312 = vperm.xlu0 %311, %v309
        %v313 = vpop.permute.xlu0 %312
        %vm315 = vcmask 64512
        %v317 = vsel %vm315, %v308, 0
        %vm319 = vcmask 1043456
        %v321 = vsel %vm319, %v306, 0
        %v324 = vsel %vm319, %v307, 0
        %326 = vmatpush.bf16.msra.mxu0 0
        %327 = vmatpush.bf16.msra.mxu0 0
        %328 = vmatpush.bf16.msra.mxu0 0
        %329 = vmatpush.bf16.msra.mxu0 0
        %330 = vmatpush.bf16.msra.mxu0 0
        %331 = vmatpush.bf16.msra.mxu0 0
        %332 = vmatpush.bf16.msra.mxu0 0
        %333 = vmatpush.bf16.msra.mxu0 %v321
        %334 = vmatmul.bf16.gmra.mxu0 %v317
        %v335 = vpop.f32.mrf.mxu0
        %v336 = vadd.f32 %v313, %v335
        %v337 = vpop.f32.mrf.mxu0
        %338 = vdwg.mxu0
        %339 = vmatpush.bf16.msra.mxu0 0
        %340 = vmatpush.bf16.msra.mxu0 0
        %341 = vmatpush.bf16.msra.mxu0 0
        %342 = vmatpush.bf16.msra.mxu0 0
        %343 = vmatpush.bf16.msra.mxu0 0
        %344 = vmatpush.bf16.msra.mxu0 0
        %345 = vmatpush.bf16.msra.mxu0 0
        %346 = vmatpush.bf16.msra.mxu0 %v324
        %347 = vmatmul.bf16.gmra.mxu0 %v317
        %v348 = vpop.f32.mrf.mxu0
        %v349 = vadd.f32 %v313, %v348
        %v350 = vpop.f32.mrf.mxu0
        %351 = vdwg.mxu0
        %v352 = vmul.f32 %v336, 0.1
        %v353 = vmul.f32 %v349, 0.1
        %v354 = vmax.f32 %v336, %v352
        %v355 = vmax.f32 %v349, %v353
        %v356 = vpack.c.bf16 %v355, %v354
        %v358 = vrot.slane %v356, 2
        %v361 = vsel %vm271, %v356, %v358
        %363 = vst [vmem:[%s242] sm:$0xf] %v361
        %s364 = sand.u32 %s153, 1
        %s365 = scalar_lea.sflag [#allocation3], %s364
        %s366 = sand.u32 %s153, 1
        %s367 = smul.addr %s366, 4
        %s368 = scalar_lea.vmem [#allocation2], %s367
        // Predicated region
        $region41: #{tpu_custom_call.1} parent=39 // pred_check
          %p369 = pneg %p163
        $region42: #{tpu_custom_call.1} parent=39 // pred_check_branch
          %371 = sbr.rel (%p369) target = $region44
        $region43: #{tpu_custom_call.1} parent=39 // pred_region
          %s372 = smul.u32 2, %s24
          %374 = vsyncadd %s365, 0
          %s375 = smul.addr %s23, 2
          %s376 = sadd.s32 %s372, %s375
          %s377 = smul.addr %s376, 2
          %s378 = scalar_lea.hbm %s5, %s377
          %s380 = sshll.u32 %s368, 4
          %s381 = int_to_ptr.vmem [resolvable:$true] %s380
          %s382 = sshll.u32 %s378, 4
          %s383 = int_to_ptr.hbm [resolvable:$true] %s382
          %385 = dma.vmem_to_hbm [thread:$0]  %s381, 64, %s383, %s365
        $region44: #{tpu_custom_call.1} parent=39 // pred_fallthru
          _
      $region40: #{tpu_custom_call.1} parent=5 // pred_fallthru
        _
      %p386 = scmp.le.s32.totalorder 2, %s14
      // Predicated region
      $region45: #{tpu_custom_call.1} parent=5 // pred_check
        %p387 = pneg %p386
      $region46: #{tpu_custom_call.1} parent=5 // pred_check_branch
        %389 = sbr.rel (%p387) target = $region48
      $region47: #{tpu_custom_call.1} parent=5 // pred_region
        %s390 = ssub.s32 %s14, 2
        // Predicated region
        $region49: #{tpu_custom_call.1} parent=47 // pred_check
          %p391 = pneg %p169
        $region50: #{tpu_custom_call.1} parent=47 // pred_check_branch
          %393 = sbr.rel (%p391) target = $region52
        $region51: #{tpu_custom_call.1} parent=47 // pred_region
          %s394 = sand.u32 %s154, 1
          %s395 = scalar_lea.sflag [#allocation3], %s394
          %s396 = sand.u32 %s154, 1
          %s397 = smul.addr %s396, 4
          %s398 = scalar_lea.vmem [#allocation2], %s397
          %400 = dma.done %s395, 64
        $region52: #{tpu_custom_call.1} parent=47 // pred_fallthru
          _
      $region48: #{tpu_custom_call.1} parent=5 // pred_fallthru
        _
    $region6: #{tpu_custom_call.1} parent=1 // loop_footer
      %s18 = sadd.s32 1, %s14
    $region7: #{tpu_custom_call.1} parent=1 // loop_footer_branch
      %13 = sbr.rel target = $region3
    $region8: #{tpu_custom_call.1} parent=1 // loop_exit
      _
    %401 = vsyncpa [#allocation3], 1
    %s402 = scalar_lea.sflag [#allocation3], 1
    %403 = vsyncpa %s402, 1

</llo_original>
